<compile_context>
chip_gen: v7x
topology: tpu7x:2x2x1
jax: 0.10.0
libtpu: 0.0.40
codegen_flags: <defaults>
</compile_context>

<pallas_src>
import math
import functools

import jax
import jax.numpy as jnp
from jax.experimental import pallas as pl
from jax.experimental.pallas import tpu as pltpu


def _attn_kernel(n_head, save_outputs, approx_recip,
                 x_ref, wqkv_ref, wo_ref, bo_ref, out_ref, *rest):
    # x_ref:    (Bt, L, D)   compute dtype (bf16 or f32)
    # wqkv_ref: (D, 3D)      pre-transposed [scale*Wq ; Wk ; Wv], compute dtype
    # wo_ref:   (D, D)       pre-transposed Wo, compute dtype
    # bo_ref:   (1, D)       f32
    # out_ref:  (Bt, L, D)   original input dtype
    # rest: (a_ref, concat_ref) if save_outputs else (concat_ref,)
    if save_outputs:
        a_ref, concat_ref = rest
    else:
        (concat_ref,) = rest
        a_ref = None

    Bt, L, D = x_ref.shape
    H = n_head
    dh = D // H
    cdt = x_ref.dtype  # compute dtype chosen by the wrapper

    # Fused Q/K/V projection: one MXU matmul with M = Bt*L, N = 3D, f32 accumulation.
    x2 = x_ref[...].reshape(Bt * L, D)
    qkv = jnp.dot(x2, wqkv_ref[...], preferred_element_type=jnp.float32)   # (Bt*L, 3D) f32
    # Downcast once; feeds every per-head MXU matmul below.
    qkv = qkv.astype(cdt).reshape(Bt, L, 3 * D)

    for h in range(H):                                     # static unroll over heads
        qh = qkv[:, :, h * dh:(h + 1) * dh]                # (Bt, L, dh), already scaled
        kh = qkv[:, :, D + h * dh:D + (h + 1) * dh]        # (Bt, L, dh)
        vh = qkv[:, :, 2 * D + h * dh:2 * D + (h + 1) * dh]

        # Scores: contract the dh axis directly (no kh.T relayout), f32 accumulation.
        s = jnp.einsum('bld,bsd->bls', qh, kh,
                       preferred_element_type=jnp.float32)                 # (Bt, L, L)
        # Numerically-stable softmax.
        s = s - jnp.max(s, axis=-1, keepdims=True)
        e = jnp.exp(s)
        denom = jnp.sum(e, axis=-1, keepdims=True)
        a = e * pl.reciprocal(denom, approx=approx_recip)

        if a_ref is not None:
            a_ref[:, h] = a.astype(a_ref.dtype)

        pv = jnp.einsum('bls,bsd->bld', a.astype(cdt), vh,
                        preferred_element_type=jnp.float32)                # (Bt, L, dh)
        # Write this head's output into the concat scratch at its static lane offset.
        concat_ref[:, :, h * dh:(h + 1) * dh] = pv.astype(concat_ref.dtype)

    # Output projection on the assembled (Bt, L, D) scratch (== V.view(B, L, -1)).
    y = jnp.dot(concat_ref[...].reshape(Bt * L, D), wo_ref[...],
                preferred_element_type=jnp.float32) + bo_ref[...]
    out_ref[...] = y.reshape(Bt, L, D).astype(out_ref.dtype)


def prepare_weights(wq, wk, wv, wo, bo, *, n_head, compute_dtype=jnp.bfloat16):
    """One-time weight prep: fuse + pre-transpose + fold 1/sqrt(dh) into Wq.

    Hoist / cache this (or jit the whole call) so the (D, 3D) copy is not
    re-materialized in HBM on every invocation.
    """
    D = wq.shape[0]
    dh = D // n_head
    scale = 1.0 / math.sqrt(dh)
    wqkv_t = jnp.concatenate([wq * scale, wk, wv], axis=0).T.astype(compute_dtype)  # (D, 3D)
    wo_t = wo.T.astype(compute_dtype)                                               # (D, D)
    bo2 = bo.reshape(1, D).astype(jnp.float32)
    return wqkv_t, wo_t, bo2


def _bytes(shape, dtype):
    return int(math.prod(shape)) * jnp.dtype(dtype).itemsize


def spatial_self_attention(x, wq, wk, wv, wo, bo, *, n_head,
                           save_outputs=True, block_b=None,
                           compute_dtype=jnp.bfloat16,
                           attn_weights_dtype=jnp.float32,
                           approx_recip=True):
    B, L, D = x.shape
    assert D % n_head == 0

    # Default batch block: several batch elements per step, but keep >=2 grid steps
    # when possible so the "parallel" axis shards across both TensorCores on v7x.
    if block_b is None:
        block_b = math.gcd(B, 8)
        while block_b > 1 and B // block_b < 2:
            block_b //= 2
    assert B % block_b == 0
    grid = (B // block_b,)

    wqkv_t, wo_t, bo2 = prepare_weights(wq, wk, wv, wo, bo,
                                        n_head=n_head, compute_dtype=compute_dtype)
    x_c = x.astype(compute_dtype)

    in_specs = [
        pl.BlockSpec((block_b, L, D), lambda b: (b, 0, 0)),
        # Constant operands: whole array resident in VMEM (single copy, no per-step
        # double-buffering).
        pl.BlockSpec(memory_space=pltpu.MemorySpace.VMEM),   # wqkv_t (D, 3D)
        pl.BlockSpec(memory_space=pltpu.MemorySpace.VMEM),   # wo_t   (D, D)
        pl.BlockSpec(memory_space=pltpu.MemorySpace.VMEM),   # bo2    (1, D)
    ]

    if save_outputs:
        out_shape = (
            jax.ShapeDtypeStruct((B, L, D), x.dtype),
            jax.ShapeDtypeStruct((B, n_head, L, L), attn_weights_dtype),
        )
        out_specs = (
            pl.BlockSpec((block_b, L, D), lambda b: (b, 0, 0)),
            pl.BlockSpec((block_b, n_head, L, L), lambda b: (b, 0, 0, 0)),
        )
    else:
        out_shape = jax.ShapeDtypeStruct((B, L, D), x.dtype)
        out_specs = pl.BlockSpec((block_b, L, D), lambda b: (b, 0, 0))

    # VMEM budget from the actual per-step footprint (x/out/A double-buffered,
    # resident weights, concat scratch, qkv + score intermediates) with headroom,
    # capped at 64 MiB so it is safe on every generation (v7x physical limit).
    vmem_est = (
        2 * _bytes((block_b, L, D), compute_dtype)            # x blocks
        + 2 * _bytes((block_b, L, D), x.dtype)                # out blocks
        + _bytes((D, 3 * D), compute_dtype)                   # resident wqkv
        + _bytes((D, D), compute_dtype)                       # resident wo
        + _bytes((1, D), jnp.float32)                         # bias
        + _bytes((block_b, L, D), compute_dtype)              # concat scratch
        + _bytes((block_b * L, 3 * D), jnp.float32)           # qkv intermediate
        + 3 * _bytes((block_b, L, L), jnp.float32)            # scores / exp / probs
    )
    if save_outputs:
        vmem_est += 2 * _bytes((block_b, n_head, L, L), attn_weights_dtype)
    vmem_limit = int(min(max(2 * vmem_est + (4 << 20), 32 << 20), 64 << 20))

    result = pl.pallas_call(
        functools.partial(_attn_kernel, n_head, save_outputs, approx_recip),
        out_shape=out_shape,
        grid=grid,
        in_specs=in_specs,
        out_specs=out_specs,
        scratch_shapes=[pltpu.VMEM((block_b, L, D), compute_dtype)],  # head-concat scratch
        compiler_params=pltpu.CompilerParams(
            dimension_semantics=("parallel",),
            vmem_limit_bytes=vmem_limit),
    )(x_c, wqkv_t, wo_t, bo2)

    if save_outputs:
        out, A = result
        return out, A
    return result, None


def _reference(x, wq, wk, wv, wo, bo, n_head):
    # Pure-JAX replica of the PyTorch forward, for verification.
    B, L, D = x.shape
    H = n_head
    q = (x @ wq.T).reshape(B, L, H, -1)
    k = (x @ wk.T).reshape(B, L, H, -1)
    v = (x @ wv.T).reshape(B, L, H, -1)
    scale = 1.0 / math.sqrt(q.shape[-1])
    scores = jnp.einsum('blhd,bshd->bhls', q, k)
    A = jax.nn.softmax(scale * scores, axis=-1)
    V = jnp.einsum('bhls,bshd->blhd', A, v).reshape(B, L, -1)
    return V @ wo.T + bo, A


if __name__ == "__main__":
    B, L, d_model, n_head = 2, 16, 32, 4

    key = jax.random.PRNGKey(0)
    kx, kq, kk, kv, ko, kb = jax.random.split(key, 6)

    # Deterministic parameter init (uniform, PyTorch-Linear-like scale).
    bound = 1.0 / math.sqrt(d_model)
    x = jax.random.normal(kx, (B, L, d_model), dtype=jnp.float32)
    wq = jax.random.uniform(kq, (d_model, d_model), jnp.float32, -bound, bound)
    wk = jax.random.uniform(kk, (d_model, d_model), jnp.float32, -bound, bound)
    wv = jax.random.uniform(kv, (d_model, d_model), jnp.float32, -bound, bound)
    wo = jax.random.uniform(ko, (d_model, d_model), jnp.float32, -bound, bound)
    bo = jax.random.uniform(kb, (d_model,), jnp.float32, -bound, bound)

    out_ref, A_ref = _reference(x, wq, wk, wv, wo, bo, n_head)

    # Fast path: bf16 MXU matmuls (f32 accumulation) + approx reciprocal.
    fast = jax.jit(functools.partial(spatial_self_attention,
                                     n_head=n_head, save_outputs=True))
    out, A = fast(x, wq, wk, wv, wo, bo)
    out = jax.block_until_ready(out)
    A = jax.block_until_ready(A)
    assert out.shape == (B, L, d_model) and A.shape == (B, n_head, L, L)
    assert jnp.allclose(out, out_ref, atol=2e-2, rtol=2e-2)
    assert jnp.allclose(A, A_ref, atol=2e-2, rtol=2e-2)

    # Exact path: f32 matmuls + exact reciprocal verifies the kernel structure tightly.
    exact = jax.jit(functools.partial(spatial_self_attention,
                                      n_head=n_head, save_outputs=True,
                                      compute_dtype=jnp.float32,
                                      approx_recip=False))
    out32, A32 = exact(x, wq, wk, wv, wo, bo)
    out32 = jax.block_until_ready(out32)
    A32 = jax.block_until_ready(A32)
    assert jnp.allclose(out32, out_ref, atol=2e-5, rtol=2e-5)
    assert jnp.allclose(A32, A_ref, atol=2e-5, rtol=2e-5)

    # save_outputs=False path (PyTorch returns (out, None)); skips the A writeback.
    no_a = jax.jit(functools.partial(spatial_self_attention,
                                     n_head=n_head, save_outputs=False))
    out2, A2 = no_a(x, wq, wk, wv, wo, bo)
    out2 = jax.block_until_ready(out2)
    assert A2 is None
    assert jnp.allclose(out2, out_ref, atol=2e-2, rtol=2e-2)

    print("KERNEL_OK")
</pallas_src>

<mosaic_0001>
module attributes {stable_mosaic.version = 11 : i64} {
  func.func @_attn_kernel(%arg0: i32, %arg1: memref<1x16x32xbf16, #tpu.memory_space<vmem>>, %arg2: memref<32x96xbf16, #tpu.memory_space<vmem>>, %arg3: memref<32x32xbf16, #tpu.memory_space<vmem>>, %arg4: memref<1x32xf32, #tpu.memory_space<vmem>>, %arg5: memref<1x16x32xf32, #tpu.memory_space<vmem>>, %arg6: memref<1x4x16x16xf32, #tpu.memory_space<vmem>>, %arg7: memref<1x16x32xbf16, #tpu.memory_space<vmem>>) attributes {dimension_semantics = [#tpu.dimension_semantics<parallel>], iteration_bounds = array<i64: 2>, scalar_prefetch = 0 : i64, scratch_operands = 1 : i64, tpu.core_type = #tpu.core_type<tc>, window_params = [{transform_indices = @transform_0, window_bounds = array<i64: 1, 16, 32>}, {pipeline_mode = #tpu.pipeline_mode<synchronous>, transform_indices = @transform_1, window_bounds = array<i64: 32, 96>}, {pipeline_mode = #tpu.pipeline_mode<synchronous>, transform_indices = @transform_2, window_bounds = array<i64: 32, 32>}, {pipeline_mode = #tpu.pipeline_mode<synchronous>, transform_indices = @transform_3, window_bounds = array<i64: 1, 32>}, {transform_indices = @transform_4, window_bounds = array<i64: 1, 16, 32>}, {transform_indices = @transform_5, window_bounds = array<i64: 1, 4, 16, 16>}]} {
    %c0 = arith.constant 0 : index
    %c0_0 = arith.constant 0 : index
    %c0_1 = arith.constant 0 : index
    %0 = vector.load %arg1[%c0, %c0_0, %c0_1] : memref<1x16x32xbf16, #tpu.memory_space<vmem>>, vector<1x16x32xbf16>
    %1 = vector.shape_cast %0 : vector<1x16x32xbf16> to vector<16x32xbf16>
    %c0_2 = arith.constant 0 : index
    %c0_3 = arith.constant 0 : index
    %2 = vector.load %arg2[%c0_2, %c0_3] : memref<32x96xbf16, #tpu.memory_space<vmem>>, vector<32x96xbf16>
    %cst = arith.constant dense<0.000000e+00> : vector<16x96xf32>
    %3 = tpu.matmul %1, %2, %cst {dimension_numbers = #tpu.dot_dimension_numbers<[1], [0], [0], [1], [0, 0, 1, 1], [], []>} : vector<16x32xbf16>, vector<32x96xbf16>, vector<16x96xf32> -> vector<16x96xf32>
    %4 = arith.truncf %3 : vector<16x96xf32> to vector<16x96xbf16>
    %5 = vector.shape_cast %4 : vector<16x96xbf16> to vector<1x16x96xbf16>
    %6 = vector.extract_strided_slice %5 {offsets = [0, 0, 0], sizes = [1, 16, 8], strides = [1, 1, 1]} : vector<1x16x96xbf16> to vector<1x16x8xbf16>
    %7 = vector.extract_strided_slice %5 {offsets = [0, 0, 32], sizes = [1, 16, 8], strides = [1, 1, 1]} : vector<1x16x96xbf16> to vector<1x16x8xbf16>
    %8 = vector.extract_strided_slice %5 {offsets = [0, 0, 64], sizes = [1, 16, 8], strides = [1, 1, 1]} : vector<1x16x96xbf16> to vector<1x16x8xbf16>
    "tpu.trace_start"() <{level = 10 : i32, message = "bld,bsd->bls"}> : () -> ()
    %cst_4 = arith.constant dense<0.000000e+00> : vector<1x16x16xf32>
    %9 = tpu.matmul %6, %7, %cst_4 {dimension_numbers = #tpu.dot_dimension_numbers<[2], [2], [1], [1], [0, 0, 0, 1, 1, 1], [0], [0]>} : vector<1x16x8xbf16>, vector<1x16x8xbf16>, vector<1x16x16xf32> -> vector<1x16x16xf32>
    "tpu.trace_stop"() : () -> ()
    %cst_5 = arith.constant dense<0xFF800000> : vector<1x16xf32>
    %10 = vector.multi_reduction <maximumf>, %9, %cst_5 [2] : vector<1x16x16xf32> to vector<1x16xf32>
    %11 = vector.shape_cast %10 : vector<1x16xf32> to vector<1x16x1xf32>
    %12 = vector.broadcast %11 : vector<1x16x1xf32> to vector<1x16x16xf32>
    %13 = arith.subf %9, %12 : vector<1x16x16xf32>
    %14 = math.exp %13 : vector<1x16x16xf32>
    %cst_6 = arith.constant dense<0.000000e+00> : vector<1x16xf32>
    %15 = vector.multi_reduction <add>, %14, %cst_6 [2] : vector<1x16x16xf32> to vector<1x16xf32>
    %16 = vector.shape_cast %15 : vector<1x16xf32> to vector<1x16x1xf32>
    %17 = tpu.reciprocal %16 {approx = true} : vector<1x16x1xf32> -> vector<1x16x1xf32>
    %18 = vector.broadcast %17 : vector<1x16x1xf32> to vector<1x16x16xf32>
    %19 = arith.mulf %14, %18 : vector<1x16x16xf32>
    %c0_7 = arith.constant 0 : index
    %c0_8 = arith.constant 0 : index
    %c0_9 = arith.constant 0 : index
    %c0_10 = arith.constant 0 : index
    %20 = vector.load %arg6[%c0_7, %c0_8, %c0_9, %c0_10] : memref<1x4x16x16xf32, #tpu.memory_space<vmem>>, vector<1x1x16x16xf32>
    %21 = vector.shape_cast %20 : vector<1x1x16x16xf32> to vector<1x16x16xf32>
    %22 = vector.shape_cast %19 : vector<1x16x16xf32> to vector<1x1x16x16xf32>
    tpu.vector_store %arg6[%c0_7, %c0_8, %c0_9, %c0_10], %22 {strides = array<i32>} : memref<1x4x16x16xf32, #tpu.memory_space<vmem>>, vector<1x1x16x16xf32>,
    %23 = arith.truncf %19 : vector<1x16x16xf32> to vector<1x16x16xbf16>
    "tpu.trace_start"() <{level = 10 : i32, message = "bls,bsd->bld"}> : () -> ()
    %cst_11 = arith.constant dense<0.000000e+00> : vector<1x16x8xf32>
    %24 = tpu.matmul %23, %8, %cst_11 {dimension_numbers = #tpu.dot_dimension_numbers<[2], [1], [1], [2], [0, 0, 0, 1, 1, 2], [0], [0]>} : vector<1x16x16xbf16>, vector<1x16x8xbf16>, vector<1x16x8xf32> -> vector<1x16x8xf32>
    "tpu.trace_stop"() : () -> ()
    %25 = arith.truncf %24 : vector<1x16x8xf32> to vector<1x16x8xbf16>
    %c0_12 = arith.constant 0 : index
    %c0_13 = arith.constant 0 : index
    %c0_14 = arith.constant 0 : index
    %26 = vector.load %arg7[%c0_12, %c0_13, %c0_14] : memref<1x16x32xbf16, #tpu.memory_space<vmem>>, vector<1x16x8xbf16>
    tpu.vector_store %arg7[%c0_12, %c0_13, %c0_14], %25 {strides = array<i32>} : memref<1x16x32xbf16, #tpu.memory_space<vmem>>, vector<1x16x8xbf16>,
    %27 = vector.extract_strided_slice %5 {offsets = [0, 0, 8], sizes = [1, 16, 8], strides = [1, 1, 1]} : vector<1x16x96xbf16> to vector<1x16x8xbf16>
    %28 = vector.extract_strided_slice %5 {offsets = [0, 0, 40], sizes = [1, 16, 8], strides = [1, 1, 1]} : vector<1x16x96xbf16> to vector<1x16x8xbf16>
    %29 = vector.extract_strided_slice %5 {offsets = [0, 0, 72], sizes = [1, 16, 8], strides = [1, 1, 1]} : vector<1x16x96xbf16> to vector<1x16x8xbf16>
    "tpu.trace_start"() <{level = 10 : i32, message = "bld,bsd->bls"}> : () -> ()
    %cst_15 = arith.constant dense<0.000000e+00> : vector<1x16x16xf32>
    %30 = tpu.matmul %27, %28, %cst_15 {dimension_numbers = #tpu.dot_dimension_numbers<[2], [2], [1], [1], [0, 0, 0, 1, 1, 1], [0], [0]>} : vector<1x16x8xbf16>, vector<1x16x8xbf16>, vector<1x16x16xf32> -> vector<1x16x16xf32>
    "tpu.trace_stop"() : () -> ()
    %cst_16 = arith.constant dense<0xFF800000> : vector<1x16xf32>
    %31 = vector.multi_reduction <maximumf>, %30, %cst_16 [2] : vector<1x16x16xf32> to vector<1x16xf32>
    %32 = vector.shape_cast %31 : vector<1x16xf32> to vector<1x16x1xf32>
    %33 = vector.broadcast %32 : vector<1x16x1xf32> to vector<1x16x16xf32>
    %34 = arith.subf %30, %33 : vector<1x16x16xf32>
    %35 = math.exp %34 : vector<1x16x16xf32>
    %cst_17 = arith.constant dense<0.000000e+00> : vector<1x16xf32>
    %36 = vector.multi_reduction <add>, %35, %cst_17 [2] : vector<1x16x16xf32> to vector<1x16xf32>
    %37 = vector.shape_cast %36 : vector<1x16xf32> to vector<1x16x1xf32>
    %38 = tpu.reciprocal %37 {approx = true} : vector<1x16x1xf32> -> vector<1x16x1xf32>
    %39 = vector.broadcast %38 : vector<1x16x1xf32> to vector<1x16x16xf32>
    %40 = arith.mulf %35, %39 : vector<1x16x16xf32>
    %c0_18 = arith.constant 0 : index
    %c1 = arith.constant 1 : index
    %c0_19 = arith.constant 0 : index
    %c0_20 = arith.constant 0 : index
    %41 = vector.load %arg6[%c0_18, %c1, %c0_19, %c0_20] : memref<1x4x16x16xf32, #tpu.memory_space<vmem>>, vector<1x1x16x16xf32>
    %42 = vector.shape_cast %41 : vector<1x1x16x16xf32> to vector<1x16x16xf32>
    %43 = vector.shape_cast %40 : vector<1x16x16xf32> to vector<1x1x16x16xf32>
    tpu.vector_store %arg6[%c0_18, %c1, %c0_19, %c0_20], %43 {strides = array<i32>} : memref<1x4x16x16xf32, #tpu.memory_space<vmem>>, vector<1x1x16x16xf32>,
    %44 = arith.truncf %40 : vector<1x16x16xf32> to vector<1x16x16xbf16>
    "tpu.trace_start"() <{level = 10 : i32, message = "bls,bsd->bld"}> : () -> ()
    %cst_21 = arith.constant dense<0.000000e+00> : vector<1x16x8xf32>
    %45 = tpu.matmul %44, %29, %cst_21 {dimension_numbers = #tpu.dot_dimension_numbers<[2], [1], [1], [2], [0, 0, 0, 1, 1, 2], [0], [0]>} : vector<1x16x16xbf16>, vector<1x16x8xbf16>, vector<1x16x8xf32> -> vector<1x16x8xf32>
    "tpu.trace_stop"() : () -> ()
    %46 = arith.truncf %45 : vector<1x16x8xf32> to vector<1x16x8xbf16>
    %c0_22 = arith.constant 0 : index
    %c0_23 = arith.constant 0 : index
    %c8 = arith.constant 8 : index
    %47 = vector.load %arg7[%c0_22, %c0_23, %c8] : memref<1x16x32xbf16, #tpu.memory_space<vmem>>, vector<1x16x8xbf16>
    tpu.vector_store %arg7[%c0_22, %c0_23, %c8], %46 {strides = array<i32>} : memref<1x16x32xbf16, #tpu.memory_space<vmem>>, vector<1x16x8xbf16>,
    %48 = vector.extract_strided_slice %5 {offsets = [0, 0, 16], sizes = [1, 16, 8], strides = [1, 1, 1]} : vector<1x16x96xbf16> to vector<1x16x8xbf16>
    %49 = vector.extract_strided_slice %5 {offsets = [0, 0, 48], sizes = [1, 16, 8], strides = [1, 1, 1]} : vector<1x16x96xbf16> to vector<1x16x8xbf16>
    %50 = vector.extract_strided_slice %5 {offsets = [0, 0, 80], sizes = [1, 16, 8], strides = [1, 1, 1]} : vector<1x16x96xbf16> to vector<1x16x8xbf16>
    "tpu.trace_start"() <{level = 10 : i32, message = "bld,bsd->bls"}> : () -> ()
    %cst_24 = arith.constant dense<0.000000e+00> : vector<1x16x16xf32>
    %51 = tpu.matmul %48, %49, %cst_24 {dimension_numbers = #tpu.dot_dimension_numbers<[2], [2], [1], [1], [0, 0, 0, 1, 1, 1], [0], [0]>} : vector<1x16x8xbf16>, vector<1x16x8xbf16>, vector<1x16x16xf32> -> vector<1x16x16xf32>
    "tpu.trace_stop"() : () -> ()
    %cst_25 = arith.constant dense<0xFF800000> : vector<1x16xf32>
    %52 = vector.multi_reduction <maximumf>, %51, %cst_25 [2] : vector<1x16x16xf32> to vector<1x16xf32>
    %53 = vector.shape_cast %52 : vector<1x16xf32> to vector<1x16x1xf32>
    %54 = vector.broadcast %53 : vector<1x16x1xf32> to vector<1x16x16xf32>
    %55 = arith.subf %51, %54 : vector<1x16x16xf32>
    %56 = math.exp %55 : vector<1x16x16xf32>
    %cst_26 = arith.constant dense<0.000000e+00> : vector<1x16xf32>
    %57 = vector.multi_reduction <add>, %56, %cst_26 [2] : vector<1x16x16xf32> to vector<1x16xf32>
    %58 = vector.shape_cast %57 : vector<1x16xf32> to vector<1x16x1xf32>
    %59 = tpu.reciprocal %58 {approx = true} : vector<1x16x1xf32> -> vector<1x16x1xf32>
    %60 = vector.broadcast %59 : vector<1x16x1xf32> to vector<1x16x16xf32>
    %61 = arith.mulf %56, %60 : vector<1x16x16xf32>
    %c0_27 = arith.constant 0 : index
    %c2 = arith.constant 2 : index
    %c0_28 = arith.constant 0 : index
    %c0_29 = arith.constant 0 : index
    %62 = vector.load %arg6[%c0_27, %c2, %c0_28, %c0_29] : memref<1x4x16x16xf32, #tpu.memory_space<vmem>>, vector<1x1x16x16xf32>
    %63 = vector.shape_cast %62 : vector<1x1x16x16xf32> to vector<1x16x16xf32>
    %64 = vector.shape_cast %61 : vector<1x16x16xf32> to vector<1x1x16x16xf32>
    tpu.vector_store %arg6[%c0_27, %c2, %c0_28, %c0_29], %64 {strides = array<i32>} : memref<1x4x16x16xf32, #tpu.memory_space<vmem>>, vector<1x1x16x16xf32>,
    %65 = arith.truncf %61 : vector<1x16x16xf32> to vector<1x16x16xbf16>
    "tpu.trace_start"() <{level = 10 : i32, message = "bls,bsd->bld"}> : () -> ()
    %cst_30 = arith.constant dense<0.000000e+00> : vector<1x16x8xf32>
    %66 = tpu.matmul %65, %50, %cst_30 {dimension_numbers = #tpu.dot_dimension_numbers<[2], [1], [1], [2], [0, 0, 0, 1, 1, 2], [0], [0]>} : vector<1x16x16xbf16>, vector<1x16x8xbf16>, vector<1x16x8xf32> -> vector<1x16x8xf32>
    "tpu.trace_stop"() : () -> ()
    %67 = arith.truncf %66 : vector<1x16x8xf32> to vector<1x16x8xbf16>
    %c0_31 = arith.constant 0 : index
    %c0_32 = arith.constant 0 : index
    %c16 = arith.constant 16 : index
    %68 = vector.load %arg7[%c0_31, %c0_32, %c16] : memref<1x16x32xbf16, #tpu.memory_space<vmem>>, vector<1x16x8xbf16>
    tpu.vector_store %arg7[%c0_31, %c0_32, %c16], %67 {strides = array<i32>} : memref<1x16x32xbf16, #tpu.memory_space<vmem>>, vector<1x16x8xbf16>,
    %69 = vector.extract_strided_slice %5 {offsets = [0, 0, 24], sizes = [1, 16, 8], strides = [1, 1, 1]} : vector<1x16x96xbf16> to vector<1x16x8xbf16>
    %70 = vector.extract_strided_slice %5 {offsets = [0, 0, 56], sizes = [1, 16, 8], strides = [1, 1, 1]} : vector<1x16x96xbf16> to vector<1x16x8xbf16>
    %71 = vector.extract_strided_slice %5 {offsets = [0, 0, 88], sizes = [1, 16, 8], strides = [1, 1, 1]} : vector<1x16x96xbf16> to vector<1x16x8xbf16>
    "tpu.trace_start"() <{level = 10 : i32, message = "bld,bsd->bls"}> : () -> ()
    %cst_33 = arith.constant dense<0.000000e+00> : vector<1x16x16xf32>
    %72 = tpu.matmul %69, %70, %cst_33 {dimension_numbers = #tpu.dot_dimension_numbers<[2], [2], [1], [1], [0, 0, 0, 1, 1, 1], [0], [0]>} : vector<1x16x8xbf16>, vector<1x16x8xbf16>, vector<1x16x16xf32> -> vector<1x16x16xf32>
    "tpu.trace_stop"() : () -> ()
    %cst_34 = arith.constant dense<0xFF800000> : vector<1x16xf32>
    %73 = vector.multi_reduction <maximumf>, %72, %cst_34 [2] : vector<1x16x16xf32> to vector<1x16xf32>
    %74 = vector.shape_cast %73 : vector<1x16xf32> to vector<1x16x1xf32>
    %75 = vector.broadcast %74 : vector<1x16x1xf32> to vector<1x16x16xf32>
    %76 = arith.subf %72, %75 : vector<1x16x16xf32>
    %77 = math.exp %76 : vector<1x16x16xf32>
    %cst_35 = arith.constant dense<0.000000e+00> : vector<1x16xf32>
    %78 = vector.multi_reduction <add>, %77, %cst_35 [2] : vector<1x16x16xf32> to vector<1x16xf32>
    %79 = vector.shape_cast %78 : vector<1x16xf32> to vector<1x16x1xf32>
    %80 = tpu.reciprocal %79 {approx = true} : vector<1x16x1xf32> -> vector<1x16x1xf32>
    %81 = vector.broadcast %80 : vector<1x16x1xf32> to vector<1x16x16xf32>
    %82 = arith.mulf %77, %81 : vector<1x16x16xf32>
    %c0_36 = arith.constant 0 : index
    %c3 = arith.constant 3 : index
    %c0_37 = arith.constant 0 : index
    %c0_38 = arith.constant 0 : index
    %83 = vector.load %arg6[%c0_36, %c3, %c0_37, %c0_38] : memref<1x4x16x16xf32, #tpu.memory_space<vmem>>, vector<1x1x16x16xf32>
    %84 = vector.shape_cast %83 : vector<1x1x16x16xf32> to vector<1x16x16xf32>
    %85 = vector.shape_cast %82 : vector<1x16x16xf32> to vector<1x1x16x16xf32>
    tpu.vector_store %arg6[%c0_36, %c3, %c0_37, %c0_38], %85 {strides = array<i32>} : memref<1x4x16x16xf32, #tpu.memory_space<vmem>>, vector<1x1x16x16xf32>,
    %86 = arith.truncf %82 : vector<1x16x16xf32> to vector<1x16x16xbf16>
    "tpu.trace_start"() <{level = 10 : i32, message = "bls,bsd->bld"}> : () -> ()
    %cst_39 = arith.constant dense<0.000000e+00> : vector<1x16x8xf32>
    %87 = tpu.matmul %86, %71, %cst_39 {dimension_numbers = #tpu.dot_dimension_numbers<[2], [1], [1], [2], [0, 0, 0, 1, 1, 2], [0], [0]>} : vector<1x16x16xbf16>, vector<1x16x8xbf16>, vector<1x16x8xf32> -> vector<1x16x8xf32>
    "tpu.trace_stop"() : () -> ()
    %88 = arith.truncf %87 : vector<1x16x8xf32> to vector<1x16x8xbf16>
    %c0_40 = arith.constant 0 : index
    %c0_41 = arith.constant 0 : index
    %c24 = arith.constant 24 : index
    %89 = vector.load %arg7[%c0_40, %c0_41, %c24] : memref<1x16x32xbf16, #tpu.memory_space<vmem>>, vector<1x16x8xbf16>
    tpu.vector_store %arg7[%c0_40, %c0_41, %c24], %88 {strides = array<i32>} : memref<1x16x32xbf16, #tpu.memory_space<vmem>>, vector<1x16x8xbf16>,
    %c0_42 = arith.constant 0 : index
    %c0_43 = arith.constant 0 : index
    %c0_44 = arith.constant 0 : index
    %90 = vector.load %arg7[%c0_42, %c0_43, %c0_44] : memref<1x16x32xbf16, #tpu.memory_space<vmem>>, vector<1x16x32xbf16>
    %91 = vector.shape_cast %90 : vector<1x16x32xbf16> to vector<16x32xbf16>
    %c0_45 = arith.constant 0 : index
    %c0_46 = arith.constant 0 : index
    %92 = vector.load %arg3[%c0_45, %c0_46] : memref<32x32xbf16, #tpu.memory_space<vmem>>, vector<32x32xbf16>
    %cst_47 = arith.constant dense<0.000000e+00> : vector<16x32xf32>
    %93 = tpu.matmul %91, %92, %cst_47 {dimension_numbers = #tpu.dot_dimension_numbers<[1], [0], [0], [1], [0, 0, 1, 1], [], []>} : vector<16x32xbf16>, vector<32x32xbf16>, vector<16x32xf32> -> vector<16x32xf32>
    %c0_48 = arith.constant 0 : index
    %c0_49 = arith.constant 0 : index
    %94 = vector.load %arg4[%c0_48, %c0_49] : memref<1x32xf32, #tpu.memory_space<vmem>>, vector<1x32xf32>
    %95 = vector.broadcast %94 : vector<1x32xf32> to vector<16x32xf32>
    %96 = arith.addf %93, %95 : vector<16x32xf32>
    %97 = vector.shape_cast %96 : vector<16x32xf32> to vector<1x16x32xf32>
    %c0_50 = arith.constant 0 : index
    %c0_51 = arith.constant 0 : index
    %c0_52 = arith.constant 0 : index
    %98 = vector.load %arg5[%c0_50, %c0_51, %c0_52] : memref<1x16x32xf32, #tpu.memory_space<vmem>>, vector<1x16x32xf32>
    tpu.vector_store %arg5[%c0_50, %c0_51, %c0_52], %97 {strides = array<i32>} : memref<1x16x32xf32, #tpu.memory_space<vmem>>, vector<1x16x32xf32>,
    return
  }
  func.func @transform_0(%arg0: i32) -> (i32, i32, i32) {
    %c0_i32 = arith.constant 0 : i32
    %c0_i32_0 = arith.constant 0 : i32
    %c0_i32_1 = arith.constant 0 : i32
    return %arg0, %c0_i32, %c0_i32_0 : i32, i32, i32
  }
  func.func @transform_1(%arg0: i32) -> (i32, i32) {
    %c0_i32 = arith.constant 0 : i32
    %c0_i32_0 = arith.constant 0 : i32
    %c0_i32_1 = arith.constant 0 : i32
    return %c0_i32, %c0_i32_0 : i32, i32
  }
  func.func @transform_2(%arg0: i32) -> (i32, i32) {
    %c0_i32 = arith.constant 0 : i32
    %c0_i32_0 = arith.constant 0 : i32
    %c0_i32_1 = arith.constant 0 : i32
    return %c0_i32, %c0_i32_0 : i32, i32
  }
  func.func @transform_3(%arg0: i32) -> (i32, i32) {
    %c0_i32 = arith.constant 0 : i32
    %c0_i32_0 = arith.constant 0 : i32
    %c0_i32_1 = arith.constant 0 : i32
    return %c0_i32, %c0_i32_0 : i32, i32
  }
  func.func @transform_4(%arg0: i32) -> (i32, i32, i32) {
    %c0_i32 = arith.constant 0 : i32
    %c0_i32_0 = arith.constant 0 : i32
    %c0_i32_1 = arith.constant 0 : i32
    return %arg0, %c0_i32, %c0_i32_0 : i32, i32, i32
  }
  func.func @transform_5(%arg0: i32) -> (i32, i32, i32, i32) {
    %c0_i32 = arith.constant 0 : i32
    %c0_i32_0 = arith.constant 0 : i32
    %c0_i32_1 = arith.constant 0 : i32
    %c0_i32_2 = arith.constant 0 : i32
    return %arg0, %c0_i32, %c0_i32_0, %c0_i32_1 : i32, i32, i32, i32
  }
}

</mosaic_0001>

<llo_original>
// kernel: spatial_self_attention.1
$region0: #{spatial_self_attention.1}
  #allocation0 [shape = 'u32[]', space=smem, size = 0x4, offset = 0x4, fixed_abs, tag = 'smem constant byte address 0x4 - core index']
  #allocation1 [shape = 'u32[144,128]{1,0:T(1,128)}', space=vmem, size = 0x12000, scoped, tag = 'internal scratch']
  #allocation2 [shape = 'bf16[1,16,32]{2,1,0:T(16,128)(2,1)}', space=vmem, size = 0x1000, scoped, tag = 'scratch operand']
  %s0 = inlined_call_operand.vmem [shape: bf16[2,16,32], index: 0, kind: input, shape index: {}]
  %s1 = inlined_call_operand.vmem [shape: bf16[32,96], index: 1, kind: input, shape index: {}]
  %s2 = inlined_call_operand.vmem [shape: bf16[32,32], index: 2, kind: input, shape index: {}]
  %s3 = inlined_call_operand.vmem [shape: f32[1,32], index: 3, kind: input, shape index: {}]
  %s4 = inlined_call_operand.hbm [shape: f32[2,16,32], index: 4, kind: output, shape index: {0}]
  %s5 = inlined_call_operand.hbm [shape: f32[2,4,16,16], index: 5, kind: output, shape index: {1}]
  %6 = xla_tuple %s4, %s5
  %s7 = sld [smem:[#allocation0]]
  $region57: #{spatial_self_attention.1} parent=0
    _
  %s9 = ssub.s32 1, %s7
  %s10 = scalar_select 0, %s9, %s7
  $region1: #{spatial_self_attention.1} parent=0
    #allocation3 [shape = 'u8[16384]{0}', space=vmem, size = 0x4000, scoped, tag = 'output window, operand 0']
    #allocation4 [shape = 's32[2]{0}', space=sflag, size = 0x8, scoped, tag = 'scoped memory for spatial_self_attention.1']
    #allocation5 [shape = 'u8[65536]{0}', space=vmem, size = 0x10000, scoped, tag = 'output window, operand 1']
    #allocation6 [shape = 's32[2]{0}', space=sflag, size = 0x8, scoped, tag = 'scoped memory for spatial_self_attention.1']
    %11 = vsyncpa [#allocation4], 0
    %s12 = scalar_lea.sflag [#allocation4], 1
    %13 = vsyncpa %s12, 0
    %14 = vsyncpa [#allocation6], 0
    %s15 = scalar_lea.sflag [#allocation6], 1
    %16 = vsyncpa %s15, 0
    loop: start=0, step=1, limit=4
    $region2: #{spatial_self_attention.1} parent=1 // loop_pre_header
      _
    $region3: #{spatial_self_attention.1} parent=1 // loop_header
      %s18 = sphi 0, %s22
      %p19 = scmp.ge.s32.totalorder %s18, 4
      %s28 = sphi 0, %s30
      %s31 = sphi 0, %s28
      %s32 = sphi 0, %s31
      %s48 = sphi 0, %s32
      %s52 = sphi 0, %s52
      %s54 = sphi 0, %s52
      %s55 = sphi 0, %s54
      %s69 = sphi 0, %s55
      %s73 = sphi 0, %s73
      %s75 = sphi 0, %s73
      %s76 = sphi 0, %s75
      %s90 = sphi 0, %s76
      %s94 = sphi 0, %s94
      %s96 = sphi 0, %s94
      %s97 = sphi 0, %s96
      %s111 = sphi 0, %s97
      %s117 = sphi 0, %s119
      %s120 = sphi 0, %s117
      %s121 = sphi 0, %s120
      %s137 = sphi 0, %s121
      %s143 = sphi 0, %s145
      %s146 = sphi 0, %s143
      %s147 = sphi 0, %s146
      %s163 = sphi 0, %s147
    $region4: #{spatial_self_attention.1} parent=1 // loop_header_branch
      %21 = sbr.rel (%p19) target = $region8
    $region5: #{spatial_self_attention.1} parent=1 // loop_body
      %s23 = ssub.s32 %s18, 1
      %s24 = ssub.s32 %s18, 2
      %s25 = sadd.s32 %s18, 1
      %s26 = ssub.s32 %s18, %s25
      %p27 = scmp.eq.s32.totalorder %s26, 0
      %s29 = sadd.s32 %s28, 1
      %s30 = scalar_select %p27, %s28, %s29
      %p33 = pneg %p27
      %p34 = scmp.eq.s32.totalorder %s18, 1
      %p35 = por %p33, %p34
      %p36 = scmp.ne.s32.totalorder %s28, %s31
      %p37 = scmp.eq.s32.totalorder %s18, 0
      %p38 = por %p36, %p37
      %p39 = scmp.ne.s32.totalorder %s28, %s31
      %p40 = scmp.eq.s32.totalorder %s23, 1
      %p41 = por %p39, %p40
      %p42 = scmp.ne.s32.totalorder %s31, %s32
      %p43 = scmp.eq.s32.totalorder %s23, 0
      %p44 = por %p42, %p43
      %p45 = scmp.ne.s32.totalorder %s31, %s32
      %p46 = scmp.eq.s32.totalorder %s24, 1
      %p47 = por %p45, %p46
      %p49 = scmp.ne.s32.totalorder %s32, %s48
      %p50 = scmp.eq.s32.totalorder %s24, 0
      %p51 = por %p49, %p50
      %s53 = sadd.s32 %s52, 1
      %p56 = scmp.eq.s32.totalorder %s18, 1
      %p57 = scmp.ne.s32.totalorder %s52, %s54
      %p58 = scmp.eq.s32.totalorder %s18, 0
      %p59 = por %p57, %p58
      %p60 = scmp.ne.s32.totalorder %s52, %s54
      %p61 = scmp.eq.s32.totalorder %s23, 1
      %p62 = por %p60, %p61
      %p63 = scmp.ne.s32.totalorder %s54, %s55
      %p64 = scmp.eq.s32.totalorder %s23, 0
      %p65 = por %p63, %p64
      %p66 = scmp.ne.s32.totalorder %s54, %s55
      %p67 = scmp.eq.s32.totalorder %s24, 1
      %p68 = por %p66, %p67
      %p70 = scmp.ne.s32.totalorder %s55, %s69
      %p71 = scmp.eq.s32.totalorder %s24, 0
      %p72 = por %p70, %p71
      %s74 = sadd.s32 %s73, 1
      %p77 = scmp.eq.s32.totalorder %s18, 1
      %p78 = scmp.ne.s32.totalorder %s73, %s75
      %p79 = scmp.eq.s32.totalorder %s18, 0
      %p80 = por %p78, %p79
      %p81 = scmp.ne.s32.totalorder %s73, %s75
      %p82 = scmp.eq.s32.totalorder %s23, 1
      %p83 = por %p81, %p82
      %p84 = scmp.ne.s32.totalorder %s75, %s76
      %p85 = scmp.eq.s32.totalorder %s23, 0
      %p86 = por %p84, %p85
      %p87 = scmp.ne.s32.totalorder %s75, %s76
      %p88 = scmp.eq.s32.totalorder %s24, 1
      %p89 = por %p87, %p88
      %p91 = scmp.ne.s32.totalorder %s76, %s90
      %p92 = scmp.eq.s32.totalorder %s24, 0
      %p93 = por %p91, %p92
      %s95 = sadd.s32 %s94, 1
      %p98 = scmp.eq.s32.totalorder %s18, 1
      %p99 = scmp.ne.s32.totalorder %s94, %s96
      %p100 = scmp.eq.s32.totalorder %s18, 0
      %p101 = por %p99, %p100
      %p102 = scmp.ne.s32.totalorder %s94, %s96
      %p103 = scmp.eq.s32.totalorder %s23, 1
      %p104 = por %p102, %p103
      %p105 = scmp.ne.s32.totalorder %s96, %s97
      %p106 = scmp.eq.s32.totalorder %s23, 0
      %p107 = por %p105, %p106
      %p108 = scmp.ne.s32.totalorder %s96, %s97
      %p109 = scmp.eq.s32.totalorder %s24, 1
      %p110 = por %p108, %p109
      %p112 = scmp.ne.s32.totalorder %s97, %s111
      %p113 = scmp.eq.s32.totalorder %s24, 0
      %p114 = por %p112, %p113
      %s115 = ssub.s32 %s18, %s25
      %p116 = scmp.eq.s32.totalorder %s115, 0
      %s118 = sadd.s32 %s117, 1
      %s119 = scalar_select %p116, %s117, %s118
      %p122 = pneg %p116
      %p123 = scmp.eq.s32.totalorder %s18, 1
      %p124 = por %p122, %p123
      %p125 = scmp.ne.s32.totalorder %s117, %s120
      %p126 = scmp.eq.s32.totalorder %s18, 0
      %p127 = por %p125, %p126
      %p128 = scmp.ne.s32.totalorder %s117, %s120
      %p129 = scmp.eq.s32.totalorder %s23, 1
      %p130 = por %p128, %p129
      %p131 = scmp.ne.s32.totalorder %s120, %s121
      %p132 = scmp.eq.s32.totalorder %s23, 0
      %p133 = por %p131, %p132
      %p134 = scmp.ne.s32.totalorder %s120, %s121
      %p135 = scmp.eq.s32.totalorder %s24, 1
      %p136 = por %p134, %p135
      %p138 = scmp.ne.s32.totalorder %s121, %s137
      %p139 = scmp.eq.s32.totalorder %s24, 0
      %p140 = por %p138, %p139
      %s141 = ssub.s32 %s18, %s25
      %p142 = scmp.eq.s32.totalorder %s141, 0
      %s144 = sadd.s32 %s143, 1
      %s145 = scalar_select %p142, %s143, %s144
      %p148 = pneg %p142
      %p149 = scmp.eq.s32.totalorder %s18, 1
      %p150 = por %p148, %p149
      %p151 = scmp.ne.s32.totalorder %s143, %s146
      %p152 = scmp.eq.s32.totalorder %s18, 0
      %p153 = por %p151, %p152
      %p154 = scmp.ne.s32.totalorder %s143, %s146
      %p155 = scmp.eq.s32.totalorder %s23, 1
      %p156 = por %p154, %p155
      %p157 = scmp.ne.s32.totalorder %s146, %s147
      %p158 = scmp.eq.s32.totalorder %s23, 0
      %p159 = por %p157, %p158
      %p160 = scmp.ne.s32.totalorder %s146, %s147
      %p161 = scmp.eq.s32.totalorder %s24, 1
      %p162 = por %p160, %p161
      %p164 = scmp.ne.s32.totalorder %s147, %s163
      %p165 = scmp.eq.s32.totalorder %s24, 0
      %p166 = por %p164, %p165
      %p167 = scmp.le.s32.totalorder 1, %s18
      %p168 = scmp.lt.s32.totalorder %s18, 3
      %p169 = pnand %p167, %p168
      %p170 = pneg %p169
      // Predicated region
      $region9: #{spatial_self_attention.1} parent=5 // pred_check
        _
      $region10: #{spatial_self_attention.1} parent=5 // pred_check_branch
        %172 = sbr.rel (%p169) target = $region12
      $region11: #{spatial_self_attention.1} parent=5 // pred_region
        %s173 = ssub.s32 %s18, 1
        // Predicated region
        $region13: #{spatial_self_attention.1} parent=11 // pred_check
          %p174 = pneg %p65
        $region14: #{spatial_self_attention.1} parent=11 // pred_check_branch
          %176 = sbr.rel (%p174) target = $region16
        $region15: #{spatial_self_attention.1} parent=11 // pred_region
          _
        $region16: #{spatial_self_attention.1} parent=11 // pred_fallthru
          _
        // Predicated region
        $region17: #{spatial_self_attention.1} parent=11 // pred_check
          %p177 = pneg %p86
        $region18: #{spatial_self_attention.1} parent=11 // pred_check_branch
          %179 = sbr.rel (%p177) target = $region20
        $region19: #{spatial_self_attention.1} parent=11 // pred_region
          _
        $region20: #{spatial_self_attention.1} parent=11 // pred_fallthru
          _
        // Predicated region
        $region21: #{spatial_self_attention.1} parent=11 // pred_check
          %p180 = pneg %p107
        $region22: #{spatial_self_attention.1} parent=11 // pred_check_branch
          %182 = sbr.rel (%p180) target = $region24
        $region23: #{spatial_self_attention.1} parent=11 // pred_region
          _
        $region24: #{spatial_self_attention.1} parent=11 // pred_fallthru
          _
      $region12: #{spatial_self_attention.1} parent=5 // pred_fallthru
        _
      %p183 = scmp.lt.s32.totalorder %s18, 2
      // Predicated region
      $region25: #{spatial_self_attention.1} parent=5 // pred_check
        %p184 = pneg %p183
      $region26: #{spatial_self_attention.1} parent=5 // pred_check_branch
        %186 = sbr.rel (%p184) target = $region28
      $region27: #{spatial_self_attention.1} parent=5 // pred_region
        // Predicated region
        $region29: #{spatial_self_attention.1} parent=27 // pred_check
          %p187 = pneg %p38
        $region30: #{spatial_self_attention.1} parent=27 // pred_check_branch
          %189 = sbr.rel (%p187) target = $region32
        $region31: #{spatial_self_attention.1} parent=27 // pred_region
          %p190 = scmp.lt.s32.totalorder %s18, 1
          %s191 = scalar_select %p190, %s18, 1
          %s192 = smul.addr %s191, 2
          %s193 = smul.addr %s192, 4
          %s194 = scalar_lea.vmem %s0, %s193
        $region32: #{spatial_self_attention.1} parent=27 // pred_fallthru
          _
      $region28: #{spatial_self_attention.1} parent=5 // pred_fallthru
        _
      %p195 = scmp.le.s32.totalorder 1, %s18
      %p196 = scmp.lt.s32.totalorder %s18, 3
      %p197 = pnand %p195, %p196
      %p198 = pneg %p197
      // Predicated region
      $region33: #{spatial_self_attention.1} parent=5 // pred_check
        _
      $region34: #{spatial_self_attention.1} parent=5 // pred_check_branch
        %200 = sbr.rel (%p197) target = $region36
      $region35: #{spatial_self_attention.1} parent=5 // pred_region
        %s201 = ssub.s32 %s18, 1
        %p202 = scmp.lt.s32.totalorder %s23, 1
        %s203 = scalar_select %p202, %s23, 1
        %s204 = smul.addr %s203, 2
        %s205 = smul.addr %s204, 4
        %s206 = scalar_lea.vmem %s0, %s205
        %p207 = pneg %p44
        %p208 = pneg %p41
        %p209 = pneg %p65
        %p210 = pneg %p62
        %p211 = pneg %p86
        %p212 = pneg %p83
        %p213 = pneg %p107
        %p214 = pneg %p104
        %p215 = pneg %p133
        %p216 = pneg %p130
        %s217 = sand.u32 %s120, 1
        %s218 = scalar_lea.sflag [#allocation4], %s217
        %s219 = sand.u32 %s120, 1
        %s220 = smul.addr %s219, 16
        %s221 = scalar_lea.vmem [#allocation3], %s220
        %p222 = pneg %p159
        %p223 = pneg %p156
        %s224 = sand.u32 %s146, 1
        %s225 = scalar_lea.sflag [#allocation6], %s224
        %s226 = sand.u32 %s146, 1
        %s227 = smul.addr %s226, 64
        %s228 = scalar_lea.vmem [#allocation5], %s227
        %p229 = scmp.lt.s32.totalorder %s23, 1
        %s230 = scalar_select %p229, %s23, 1
        %s231 = smul.addr %s230, 2
        %s232 = smul.addr %s231, 4
        %s233 = scalar_lea.vmem %s0, %s232
        %v235 = vld [vmem:[%s233] sm:$0xf]
        %v236 = vld [vmem:[%s233 + $0x4] sm:$0xf]
        %v237 = vld [vmem:[%s1] sm:$0xf]
        %v238 = vld [vmem:[%s1 + $0x4] sm:$0xf]
        %v239 = vld [vmem:[%s1 + $0x8] sm:$0xf]
        %v240 = vld [vmem:[%s1 + $0xc] sm:$0xf]
        %v243 = vunpack.c.l.b16 %v235
        %v244 = vunpack.c.l.b16 %v236
        %v245 = vpack.c.b16 %v244, %v243
        %v250 = vunpack.c.l.b16 %v237
        %v251 = vunpack.c.l.b16 %v238
        %v252 = vunpack.c.l.b16 %v239
        %v253 = vunpack.c.l.b16 %v240
        %v254 = vpack.c.b16 %v251, %v250
        %v255 = vpack.c.b16 %v253, %v252
        %vm258 = vcmask 261120
        %v260 = vsel %vm258, %v245, 0
        %262 = vmatprep.subr.bf16.mxu0 0
        %263 = vmatpush1.bf16.msra.mxu0 %v254
        %264 = vmatprep.subr.bf16.mxu0 0
        %265 = vmatpush1.bf16.msra.mxu0 %v255
        %266 = vmatprep.subr.bf16.mxu0 0
        %267 = vmatpush1.bf16.msra.mxu0 0
        %268 = vmatprep.subr.bf16.mxu0 0
        %269 = vmatpush1.bf16.msra.mxu0 0
        %270 = vmatprep.subr.bf16.mxu0 0
        %271 = vmatpush1.bf16.msra.mxu0 0
        %272 = vmatprep.subr.bf16.mxu0 0
        %273 = vmatpush1.bf16.msra.mxu0 0
        %274 = vmatprep.subr.bf16.mxu0 0
        %275 = vmatpush1.bf16.msra.mxu0 0
        %276 = vmatprep.subr.bf16.mxu0 0
        %277 = vmatpush1.bf16.msra.mxu0 0
        %278 = vmatprep.subr.bf16.mxu0 0
        %279 = vmatpush1.bf16.msra.mxu0 0
        %280 = vmatprep.subr.bf16.mxu0 0
        %281 = vmatpush1.bf16.msra.mxu0 0
        %282 = vmatprep.subr.bf16.mxu0 0
        %283 = vmatpush1.bf16.msra.mxu0 0
        %284 = vmatprep.subr.bf16.mxu0 0
        %285 = vmatpush1.bf16.msra.mxu0 0
        %286 = vmatprep.subr.bf16.mxu0 0
        %287 = vmatpush1.bf16.msra.mxu0 0
        %288 = vmatprep.subr.bf16.mxu0 0
        %289 = vmatpush1.bf16.msra.mxu0 0
        %290 = vmatprep.subr.bf16.mxu0 0
        %291 = vmatpush1.bf16.msra.mxu0 0
        %292 = vmatprep.subr.bf16.mxu0 0
        %293 = vmatpush1.bf16.msra.mxu0 0
        %294 = vmatprep.mubr.bf16.mxu0 0
        %295 = vmatmul.mubr.bf16.gmra.mrb[0].mxu0 %v260
        %v296 = vpop.f32.mrb[0].mxu0
        %v297 = vadd.f32 0.0, %v296
        %v298 = vpop.f32.mrb[0].mxu0
        %v299 = vpop.f32.mrb[0].mxu0
        %v300 = vadd.f32 0.0, %v299
        %v301 = vpop.f32.mrb[0].mxu0
        %302 = vdwg.mxu0
        %v303 = vpack.c.bf16 %v300, %v297
        %305 = vrot.lane.b32.xlu0 %v303, 96
        %v306 = vpop.permute.xlu0 %305
        %vm307 = vcmask 64512
        %v309 = vsel %vm307, %v303, 0
        %v312 = vsel %vm307, %v306, 0
        %314 = vmatprep.subr.bf16.mxu0 0
        %315 = vmatpush1.bf16.xpose.msra.mxu0 %v312
        %316 = vmatprep.subr.bf16.mxu0 0
        %317 = vmatpush1.bf16.xpose.msra.mxu0 0
        %318 = vmatprep.subr.bf16.mxu0 0
        %319 = vmatpush1.bf16.xpose.msra.mxu0 0
        %320 = vmatprep.subr.bf16.mxu0 0
        %321 = vmatpush1.bf16.xpose.msra.mxu0 0
        %322 = vmatprep.subr.bf16.mxu0 0
        %323 = vmatpush1.bf16.xpose.msra.mxu0 0
        %324 = vmatprep.subr.bf16.mxu0 0
        %325 = vmatpush1.bf16.xpose.msra.mxu0 0
        %326 = vmatprep.subr.bf16.mxu0 0
        %327 = vmatpush1.bf16.xpose.msra.mxu0 0
        %328 = vmatprep.subr.bf16.mxu0 0
        %329 = vmatpush1.bf16.xpose.msra.mxu0 0
        %330 = vmatprep.subr.bf16.mxu0 0
        %331 = vmatpush1.bf16.xpose.msra.mxu0 0
        %332 = vmatprep.subr.bf16.mxu0 0
        %333 = vmatpush1.bf16.xpose.msra.mxu0 0
        %334 = vmatprep.subr.bf16.mxu0 0
        %335 = vmatpush1.bf16.xpose.msra.mxu0 0
        %336 = vmatprep.subr.bf16.mxu0 0
        %337 = vmatpush1.bf16.xpose.msra.mxu0 0
        %338 = vmatprep.subr.bf16.mxu0 0
        %339 = vmatpush1.bf16.xpose.msra.mxu0 0
        %340 = vmatprep.subr.bf16.mxu0 0
        %341 = vmatpush1.bf16.xpose.msra.mxu0 0
        %342 = vmatprep.subr.bf16.mxu0 0
        %343 = vmatpush1.bf16.xpose.msra.mxu0 0
        %344 = vmatprep.subr.bf16.mxu0 0
        %345 = vmatpush1.bf16.xpose.msra.mxu0 0
        %346 = vmatprep.mubr.bf16.mxu0 0
        %347 = vmatmul.mubr.bf16.gmra.mrb[0].mxu0 %v309
        %v348 = vpop.f32.mrb[0].mxu0
        %v349 = vadd.f32 0.0, %v348
        %v350 = vpop.f32.mrb[0].mxu0
        %v351 = vpop.f32.mrb[0].mxu0
        %v352 = vadd.f32 0.0, %v351
        %v353 = vpop.f32.mrb[0].mxu0
        %354 = vdwg.mxu0
        %vm355 = vcmask 130048
        %v356 = vsel %vm355, %v349, -inf
        %357 = vmax.xlane.f32.xlu0 %v356
        %v358 = vpop.xlane.xlu0 %357
        %v359 = vsel %vm355, %v352, -inf
        %360 = vmax.xlane.f32.xlu0 %v359
        %v361 = vpop.xlane.xlu0 %360
        %v362 = vsub.f32 %v349, %v358
        %v363 = vsub.f32 %v352, %v361
        %v364 = vmul.f32 %v362, 1.442695
        %v365 = vpow.pop %v364
        %v366 = vmul.f32 %v363, 1.442695
        %v367 = vpow.pop %v366
        %v368 = vsel %vm355, %v365, 0.0
        %369 = vadd.xlane.f32.xlu0 %v368
        %v370 = vpop.xlane.xlu0 %369
        %v371 = vsel %vm355, %v367, 0.0
        %372 = vadd.xlane.f32.xlu0 %v371
        %v373 = vpop.xlane.xlu0 %372
        %v374 = vrcp.pop %v370
        %v375 = vrcp.pop %v373
        %v376 = vmul.f32 %v365, %v374
        %v377 = vmul.f32 %v367, %v375
        %378 = vst.msk [vmem:[%s228] sm:$0xff] %vm355, %v376
        %379 = vst.msk [vmem:[%s228 + $0x8] sm:$0xff] %vm355, %v377
        %v380 = vpack.c.bf16 %v377, %v376
        %381 = vrot.lane.b32.xlu0 %v303, 64
        %v382 = vpop.permute.xlu0 %381
        %v385 = vsel %vm355, %v380, 0
        %387 = vmatprep.subr.bf16.mxu0 0
        %388 = vmatpush1.bf16.msra.mxu0 %v382
        %389 = vmatprep.subr.bf16.mxu0 0
        %390 = vmatpush1.bf16.msra.mxu0 0
        %391 = vmatprep.subr.bf16.mxu0 0
        %392 = vmatpush1.bf16.msra.mxu0 0
        %393 = vmatprep.subr.bf16.mxu0 0
        %394 = vmatpush1.bf16.msra.mxu0 0
        %395 = vmatprep.subr.bf16.mxu0 0
        %396 = vmatpush1.bf16.msra.mxu0 0
        %397 = vmatprep.subr.bf16.mxu0 0
        %398 = vmatpush1.bf16.msra.mxu0 0
        %399 = vmatprep.subr.bf16.mxu0 0
        %400 = vmatpush1.bf16.msra.mxu0 0
        %401 = vmatprep.subr.bf16.mxu0 0
        %402 = vmatpush1.bf16.msra.mxu0 0
        %403 = vmatprep.subr.bf16.mxu0 0
        %404 = vmatpush1.bf16.msra.mxu0 0
        %405 = vmatprep.subr.bf16.mxu0 0
        %406 = vmatpush1.bf16.msra.mxu0 0
        %407 = vmatprep.subr.bf16.mxu0 0
        %408 = vmatpush1.bf16.msra.mxu0 0
        %409 = vmatprep.subr.bf16.mxu0 0
        %410 = vmatpush1.bf16.msra.mxu0 0
        %411 = vmatprep.subr.bf16.mxu0 0
        %412 = vmatpush1.bf16.msra.mxu0 0
        %413 = vmatprep.subr.bf16.mxu0 0
        %414 = vmatpush1.bf16.msra.mxu0 0
        %415 = vmatprep.subr.bf16.mxu0 0
        %416 = vmatpush1.bf16.msra.mxu0 0
        %417 = vmatprep.subr.bf16.mxu0 0
        %418 = vmatpush1.bf16.msra.mxu0 0
        %419 = vmatprep.mubr.bf16.mxu0 0
        %420 = vmatmul.mubr.bf16.gmra.mrb[0].mxu0 %v385
        %v421 = vpop.f32.mrb[0].mxu0
        %v422 = vadd.f32 0.0, %v421
        %v423 = vpop.f32.mrb[0].mxu0
        %v424 = vpop.f32.mrb[0].mxu0
        %v425 = vadd.f32 0.0, %v424
        %v426 = vpop.f32.mrb[0].mxu0
        %427 = vdwg.mxu0
        %v428 = vpack.c.bf16 %v425, %v422
        %429 = vst.msk [vmem:[#allocation2] sm:$0xff] %vm307, %v428
        %430 = vrot.lane.b32.xlu0 %v303, 120
        %v431 = vpop.permute.xlu0 %430
        %432 = vrot.lane.b32.xlu0 %v303, 88
        %v433 = vpop.permute.xlu0 %432
        %v435 = vsel %vm307, %v431, 0
        %v438 = vsel %vm307, %v433, 0
        %440 = vmatprep.subr.bf16.mxu0 0
        %441 = vmatpush1.bf16.xpose.msra.mxu0 %v438
        %442 = vmatprep.subr.bf16.mxu0 0
        %443 = vmatpush1.bf16.xpose.msra.mxu0 0
        %444 = vmatprep.subr.bf16.mxu0 0
        %445 = vmatpush1.bf16.xpose.msra.mxu0 0
        %446 = vmatprep.subr.bf16.mxu0 0
        %447 = vmatpush1.bf16.xpose.msra.mxu0 0
        %448 = vmatprep.subr.bf16.mxu0 0
        %449 = vmatpush1.bf16.xpose.msra.mxu0 0
        %450 = vmatprep.subr.bf16.mxu0 0
        %451 = vmatpush1.bf16.xpose.msra.mxu0 0
        %452 = vmatprep.subr.bf16.mxu0 0
        %453 = vmatpush1.bf16.xpose.msra.mxu0 0
        %454 = vmatprep.subr.bf16.mxu0 0
        %455 = vmatpush1.bf16.xpose.msra.mxu0 0
        %456 = vmatprep.subr.bf16.mxu0 0
        %457 = vmatpush1.bf16.xpose.msra.mxu0 0
        %458 = vmatprep.subr.bf16.mxu0 0
        %459 = vmatpush1.bf16.xpose.msra.mxu0 0
        %460 = vmatprep.subr.bf16.mxu0 0
        %461 = vmatpush1.bf16.xpose.msra.mxu0 0
        %462 = vmatprep.subr.bf16.mxu0 0
        %463 = vmatpush1.bf16.xpose.msra.mxu0 0
        %464 = vmatprep.subr.bf16.mxu0 0
        %465 = vmatpush1.bf16.xpose.msra.mxu0 0
        %466 = vmatprep.subr.bf16.mxu0 0
        %467 = vmatpush1.bf16.xpose.msra.mxu0 0
        %468 = vmatprep.subr.bf16.mxu0 0
        %469 = vmatpush1.bf16.xpose.msra.mxu0 0
        %470 = vmatprep.subr.bf16.mxu0 0
        %471 = vmatpush1.bf16.xpose.msra.mxu0 0
        %472 = vmatprep.mubr.bf16.mxu0 0
        %473 = vmatmul.mubr.bf16.gmra.mrb[0].mxu0 %v435
        %v474 = vpop.f32.mrb[0].mxu0
        %v475 = vadd.f32 0.0, %v474
        %v476 = vpop.f32.mrb[0].mxu0
        %v477 = vpop.f32.mrb[0].mxu0
        %v478 = vadd.f32 0.0, %v477
        %v479 = vpop.f32.mrb[0].mxu0
        %480 = vdwg.mxu0
        %v481 = vsel %vm355, %v475, -inf
        %482 = vmax.xlane.f32.xlu0 %v481
        %v483 = vpop.xlane.xlu0 %482
        %v484 = vsel %vm355, %v478, -inf
        %485 = vmax.xlane.f32.xlu0 %v484
        %v486 = vpop.xlane.xlu0 %485
        %v487 = vsub.f32 %v475, %v483
        %v488 = vsub.f32 %v478, %v486
        %v489 = vmul.f32 %v487, 1.442695
        %v490 = vpow.pop %v489
        %v491 = vmul.f32 %v488, 1.442695
        %v492 = vpow.pop %v491
        %v493 = vsel %vm355, %v490, 0.0
        %494 = vadd.xlane.f32.xlu0 %v493
        %v495 = vpop.xlane.xlu0 %494
        %v496 = vsel %vm355, %v492, 0.0
        %497 = vadd.xlane.f32.xlu0 %v496
        %v498 = vpop.xlane.xlu0 %497
        %v499 = vrcp.pop %v495
        %v500 = vrcp.pop %v498
        %v501 = vmul.f32 %v490, %v499
        %v502 = vmul.f32 %v492, %v500
        %s503 = scalar_lea.vmem %s228, 16 [#allocation5]
        %504 = vst.msk [vmem:[%s503] sm:$0xff] %vm355, %v501
        %505 = vst.msk [vmem:[%s503 + $0x8] sm:$0xff] %vm355, %v502
        %v506 = vpack.c.bf16 %v502, %v501
        %507 = vrot.lane.b32.xlu0 %v303, 56
        %v508 = vpop.permute.xlu0 %507
        %v511 = vsel %vm355, %v506, 0
        %513 = vmatprep.subr.bf16.mxu0 0
        %514 = vmatpush1.bf16.msra.mxu0 %v508
        %515 = vmatprep.subr.bf16.mxu0 0
        %516 = vmatpush1.bf16.msra.mxu0 0
        %517 = vmatprep.subr.bf16.mxu0 0
        %518 = vmatpush1.bf16.msra.mxu0 0
        %519 = vmatprep.subr.bf16.mxu0 0
        %520 = vmatpush1.bf16.msra.mxu0 0
        %521 = vmatprep.subr.bf16.mxu0 0
        %522 = vmatpush1.bf16.msra.mxu0 0
        %523 = vmatprep.subr.bf16.mxu0 0
        %524 = vmatpush1.bf16.msra.mxu0 0
        %525 = vmatprep.subr.bf16.mxu0 0
        %526 = vmatpush1.bf16.msra.mxu0 0
        %527 = vmatprep.subr.bf16.mxu0 0
        %528 = vmatpush1.bf16.msra.mxu0 0
        %529 = vmatprep.subr.bf16.mxu0 0
        %530 = vmatpush1.bf16.msra.mxu0 0
        %531 = vmatprep.subr.bf16.mxu0 0
        %532 = vmatpush1.bf16.msra.mxu0 0
        %533 = vmatprep.subr.bf16.mxu0 0
        %534 = vmatpush1.bf16.msra.mxu0 0
        %535 = vmatprep.subr.bf16.mxu0 0
        %536 = vmatpush1.bf16.msra.mxu0 0
        %537 = vmatprep.subr.bf16.mxu0 0
        %538 = vmatpush1.bf16.msra.mxu0 0
        %539 = vmatprep.subr.bf16.mxu0 0
        %540 = vmatpush1.bf16.msra.mxu0 0
        %541 = vmatprep.subr.bf16.mxu0 0
        %542 = vmatpush1.bf16.msra.mxu0 0
        %543 = vmatprep.subr.bf16.mxu0 0
        %544 = vmatpush1.bf16.msra.mxu0 0
        %545 = vmatprep.mubr.bf16.mxu0 0
        %546 = vmatmul.mubr.bf16.gmra.mrb[0].mxu0 %v511
        %v547 = vpop.f32.mrb[0].mxu0
        %v548 = vadd.f32 0.0, %v547
        %v549 = vpop.f32.mrb[0].mxu0
        %v550 = vpop.f32.mrb[0].mxu0
        %v551 = vadd.f32 0.0, %v550
        %v552 = vpop.f32.mrb[0].mxu0
        %553 = vdwg.mxu0
        %v554 = vpack.c.bf16 %v551, %v548
        %556 = vrot.lane.b32.xlu0 %v554, 8
        %v557 = vpop.permute.xlu0 %556
        %vm559 = vcmask 130112
        %560 = vst.msk [vmem:[#allocation2] sm:$0xff] %vm559, %v557
        %561 = vrot.lane.b32.xlu0 %v303, 112
        %v562 = vpop.permute.xlu0 %561
        %563 = vrot.lane.b32.xlu0 %v303, 80
        %v564 = vpop.permute.xlu0 %563
        %v566 = vsel %vm307, %v562, 0
        %v569 = vsel %vm307, %v564, 0
        %571 = vmatprep.subr.bf16.mxu0 0
        %572 = vmatpush1.bf16.xpose.msra.mxu0 %v569
        %573 = vmatprep.subr.bf16.mxu0 0
        %574 = vmatpush1.bf16.xpose.msra.mxu0 0
        %575 = vmatprep.subr.bf16.mxu0 0
        %576 = vmatpush1.bf16.xpose.msra.mxu0 0
        %577 = vmatprep.subr.bf16.mxu0 0
        %578 = vmatpush1.bf16.xpose.msra.mxu0 0
        %579 = vmatprep.subr.bf16.mxu0 0
        %580 = vmatpush1.bf16.xpose.msra.mxu0 0
        %581 = vmatprep.subr.bf16.mxu0 0
        %582 = vmatpush1.bf16.xpose.msra.mxu0 0
        %583 = vmatprep.subr.bf16.mxu0 0
        %584 = vmatpush1.bf16.xpose.msra.mxu0 0
        %585 = vmatprep.subr.bf16.mxu0 0
        %586 = vmatpush1.bf16.xpose.msra.mxu0 0
        %587 = vmatprep.subr.bf16.mxu0 0
        %588 = vmatpush1.bf16.xpose.msra.mxu0 0
        %589 = vmatprep.subr.bf16.mxu0 0
        %590 = vmatpush1.bf16.xpose.msra.mxu0 0
        %591 = vmatprep.subr.bf16.mxu0 0
        %592 = vmatpush1.bf16.xpose.msra.mxu0 0
        %593 = vmatprep.subr.bf16.mxu0 0
        %594 = vmatpush1.bf16.xpose.msra.mxu0 0
        %595 = vmatprep.subr.bf16.mxu0 0
        %596 = vmatpush1.bf16.xpose.msra.mxu0 0
        %597 = vmatprep.subr.bf16.mxu0 0
        %598 = vmatpush1.bf16.xpose.msra.mxu0 0
        %599 = vmatprep.subr.bf16.mxu0 0
        %600 = vmatpush1.bf16.xpose.msra.mxu0 0
        %601 = vmatprep.subr.bf16.mxu0 0
        %602 = vmatpush1.bf16.xpose.msra.mxu0 0
        %603 = vmatprep.mubr.bf16.mxu0 0
        %604 = vmatmul.mubr.bf16.gmra.mrb[0].mxu0 %v566
        %v605 = vpop.f32.mrb[0].mxu0
        %v606 = vadd.f32 0.0, %v605
        %v607 = vpop.f32.mrb[0].mxu0
        %v608 = vpop.f32.mrb[0].mxu0
        %v609 = vadd.f32 0.0, %v608
        %v610 = vpop.f32.mrb[0].mxu0
        %611 = vdwg.mxu0
        %v612 = vsel %vm355, %v606, -inf
        %613 = vmax.xlane.f32.xlu0 %v612
        %v614 = vpop.xlane.xlu0 %613
        %v615 = vsel %vm355, %v609, -inf
        %616 = vmax.xlane.f32.xlu0 %v615
        %v617 = vpop.xlane.xlu0 %616
        %v618 = vsub.f32 %v606, %v614
        %v619 = vsub.f32 %v609, %v617
        %v620 = vmul.f32 %v618, 1.442695
        %v621 = vpow.pop %v620
        %v622 = vmul.f32 %v619, 1.442695
        %v623 = vpow.pop %v622
        %v624 = vsel %vm355, %v621, 0.0
        %625 = vadd.xlane.f32.xlu0 %v624
        %v626 = vpop.xlane.xlu0 %625
        %v627 = vsel %vm355, %v623, 0.0
        %628 = vadd.xlane.f32.xlu0 %v627
        %v629 = vpop.xlane.xlu0 %628
        %v630 = vrcp.pop %v626
        %v631 = vrcp.pop %v629
        %v632 = vmul.f32 %v621, %v630
        %v633 = vmul.f32 %v623, %v631
        %s634 = scalar_lea.vmem %s228, 32 [#allocation5]
        %635 = vst.msk [vmem:[%s634] sm:$0xff] %vm355, %v632
        %636 = vst.msk [vmem:[%s634 + $0x8] sm:$0xff] %vm355, %v633
        %v637 = vpack.c.bf16 %v633, %v632
        %638 = vrot.lane.b32.xlu0 %v303, 48
        %v639 = vpop.permute.xlu0 %638
        %v642 = vsel %vm355, %v637, 0
        %644 = vmatprep.subr.bf16.mxu0 0
        %645 = vmatpush1.bf16.msra.mxu0 %v639
        %646 = vmatprep.subr.bf16.mxu0 0
        %647 = vmatpush1.bf16.msra.mxu0 0
        %648 = vmatprep.subr.bf16.mxu0 0
        %649 = vmatpush1.bf16.msra.mxu0 0
        %650 = vmatprep.subr.bf16.mxu0 0
        %651 = vmatpush1.bf16.msra.mxu0 0
        %652 = vmatprep.subr.bf16.mxu0 0
        %653 = vmatpush1.bf16.msra.mxu0 0
        %654 = vmatprep.subr.bf16.mxu0 0
        %655 = vmatpush1.bf16.msra.mxu0 0
        %656 = vmatprep.subr.bf16.mxu0 0
        %657 = vmatpush1.bf16.msra.mxu0 0
        %658 = vmatprep.subr.bf16.mxu0 0
        %659 = vmatpush1.bf16.msra.mxu0 0
        %660 = vmatprep.subr.bf16.mxu0 0
        %661 = vmatpush1.bf16.msra.mxu0 0
        %662 = vmatprep.subr.bf16.mxu0 0
        %663 = vmatpush1.bf16.msra.mxu0 0
        %664 = vmatprep.subr.bf16.mxu0 0
        %665 = vmatpush1.bf16.msra.mxu0 0
        %666 = vmatprep.subr.bf16.mxu0 0
        %667 = vmatpush1.bf16.msra.mxu0 0
        %668 = vmatprep.subr.bf16.mxu0 0
        %669 = vmatpush1.bf16.msra.mxu0 0
        %670 = vmatprep.subr.bf16.mxu0 0
        %671 = vmatpush1.bf16.msra.mxu0 0
        %672 = vmatprep.subr.bf16.mxu0 0
        %673 = vmatpush1.bf16.msra.mxu0 0
        %674 = vmatprep.subr.bf16.mxu0 0
        %675 = vmatpush1.bf16.msra.mxu0 0
        %676 = vmatprep.mubr.bf16.mxu0 0
        %677 = vmatmul.mubr.bf16.gmra.mrb[0].mxu0 %v642
        %v678 = vpop.f32.mrb[0].mxu0
        %v679 = vadd.f32 0.0, %v678
        %v680 = vpop.f32.mrb[0].mxu0
        %v681 = vpop.f32.mrb[0].mxu0
        %v682 = vadd.f32 0.0, %v681
        %v683 = vpop.f32.mrb[0].mxu0
        %684 = vdwg.mxu0
        %v685 = vpack.c.bf16 %v682, %v679
        %687 = vrot.lane.b32.xlu0 %v685, 16
        %v688 = vpop.permute.xlu0 %687
        %vm690 = vcmask 195712
        %691 = vst.msk [vmem:[#allocation2] sm:$0xff] %vm690, %v688
        %692 = vrot.lane.b32.xlu0 %v303, 104
        %v693 = vpop.permute.xlu0 %692
        %694 = vrot.lane.b32.xlu0 %v303, 72
        %v695 = vpop.permute.xlu0 %694
        %v697 = vsel %vm307, %v693, 0
        %v700 = vsel %vm307, %v695, 0
        %702 = vmatprep.subr.bf16.mxu0 0
        %703 = vmatpush1.bf16.xpose.msra.mxu0 %v700
        %704 = vmatprep.subr.bf16.mxu0 0
        %705 = vmatpush1.bf16.xpose.msra.mxu0 0
        %706 = vmatprep.subr.bf16.mxu0 0
        %707 = vmatpush1.bf16.xpose.msra.mxu0 0
        %708 = vmatprep.subr.bf16.mxu0 0
        %709 = vmatpush1.bf16.xpose.msra.mxu0 0
        %710 = vmatprep.subr.bf16.mxu0 0
        %711 = vmatpush1.bf16.xpose.msra.mxu0 0
        %712 = vmatprep.subr.bf16.mxu0 0
        %713 = vmatpush1.bf16.xpose.msra.mxu0 0
        %714 = vmatprep.subr.bf16.mxu0 0
        %715 = vmatpush1.bf16.xpose.msra.mxu0 0
        %716 = vmatprep.subr.bf16.mxu0 0
        %717 = vmatpush1.bf16.xpose.msra.mxu0 0
        %718 = vmatprep.subr.bf16.mxu0 0
        %719 = vmatpush1.bf16.xpose.msra.mxu0 0
        %720 = vmatprep.subr.bf16.mxu0 0
        %721 = vmatpush1.bf16.xpose.msra.mxu0 0
        %722 = vmatprep.subr.bf16.mxu0 0
        %723 = vmatpush1.bf16.xpose.msra.mxu0 0
        %724 = vmatprep.subr.bf16.mxu0 0
        %725 = vmatpush1.bf16.xpose.msra.mxu0 0
        %726 = vmatprep.subr.bf16.mxu0 0
        %727 = vmatpush1.bf16.xpose.msra.mxu0 0
        %728 = vmatprep.subr.bf16.mxu0 0
        %729 = vmatpush1.bf16.xpose.msra.mxu0 0
        %730 = vmatprep.subr.bf16.mxu0 0
        %731 = vmatpush1.bf16.xpose.msra.mxu0 0
        %732 = vmatprep.subr.bf16.mxu0 0
        %733 = vmatpush1.bf16.xpose.msra.mxu0 0
        %734 = vmatprep.mubr.bf16.mxu0 0
        %735 = vmatmul.mubr.bf16.gmra.mrb[0].mxu0 %v697
        %v736 = vpop.f32.mrb[0].mxu0
        %v737 = vadd.f32 0.0, %v736
        %v738 = vpop.f32.mrb[0].mxu0
        %v739 = vpop.f32.mrb[0].mxu0
        %v740 = vadd.f32 0.0, %v739
        %v741 = vpop.f32.mrb[0].mxu0
        %742 = vdwg.mxu0
        %v743 = vsel %vm355, %v737, -inf
        %744 = vmax.xlane.f32.xlu0 %v743
        %v745 = vpop.xlane.xlu0 %744
        %v746 = vsel %vm355, %v740, -inf
        %747 = vmax.xlane.f32.xlu0 %v746
        %v748 = vpop.xlane.xlu0 %747
        %v749 = vsub.f32 %v737, %v745
        %v750 = vsub.f32 %v740, %v748
        %v751 = vmul.f32 %v749, 1.442695
        %v752 = vpow.pop %v751
        %v753 = vmul.f32 %v750, 1.442695
        %v754 = vpow.pop %v753
        %v755 = vsel %vm355, %v752, 0.0
        %756 = vadd.xlane.f32.xlu0 %v755
        %v757 = vpop.xlane.xlu0 %756
        %v758 = vsel %vm355, %v754, 0.0
        %759 = vadd.xlane.f32.xlu0 %v758
        %v760 = vpop.xlane.xlu0 %759
        %v761 = vrcp.pop %v757
        %v762 = vrcp.pop %v760
        %v763 = vmul.f32 %v752, %v761
        %v764 = vmul.f32 %v754, %v762
        %s765 = scalar_lea.vmem %s228, 48 [#allocation5]
        %766 = vst.msk [vmem:[%s765] sm:$0xff] %vm355, %v763
        %767 = vst.msk [vmem:[%s765 + $0x8] sm:$0xff] %vm355, %v764
        %v768 = vpack.c.bf16 %v764, %v763
        %769 = vrot.lane.b32.xlu0 %v303, 40
        %v770 = vpop.permute.xlu0 %769
        %v773 = vsel %vm355, %v768, 0
        %775 = vmatprep.subr.bf16.mxu0 0
        %776 = vmatpush1.bf16.msra.mxu0 %v770
        %777 = vmatprep.subr.bf16.mxu0 0
        %778 = vmatpush1.bf16.msra.mxu0 0
        %779 = vmatprep.subr.bf16.mxu0 0
        %780 = vmatpush1.bf16.msra.mxu0 0
        %781 = vmatprep.subr.bf16.mxu0 0
        %782 = vmatpush1.bf16.msra.mxu0 0
        %783 = vmatprep.subr.bf16.mxu0 0
        %784 = vmatpush1.bf16.msra.mxu0 0
        %785 = vmatprep.subr.bf16.mxu0 0
        %786 = vmatpush1.bf16.msra.mxu0 0
        %787 = vmatprep.subr.bf16.mxu0 0
        %788 = vmatpush1.bf16.msra.mxu0 0
        %789 = vmatprep.subr.bf16.mxu0 0
        %790 = vmatpush1.bf16.msra.mxu0 0
        %791 = vmatprep.subr.bf16.mxu0 0
        %792 = vmatpush1.bf16.msra.mxu0 0
        %793 = vmatprep.subr.bf16.mxu0 0
        %794 = vmatpush1.bf16.msra.mxu0 0
        %795 = vmatprep.subr.bf16.mxu0 0
        %796 = vmatpush1.bf16.msra.mxu0 0
        %797 = vmatprep.subr.bf16.mxu0 0
        %798 = vmatpush1.bf16.msra.mxu0 0
        %799 = vmatprep.subr.bf16.mxu0 0
        %800 = vmatpush1.bf16.msra.mxu0 0
        %801 = vmatprep.subr.bf16.mxu0 0
        %802 = vmatpush1.bf16.msra.mxu0 0
        %803 = vmatprep.subr.bf16.mxu0 0
        %804 = vmatpush1.bf16.msra.mxu0 0
        %805 = vmatprep.subr.bf16.mxu0 0
        %806 = vmatpush1.bf16.msra.mxu0 0
        %807 = vmatprep.mubr.bf16.mxu0 0
        %808 = vmatmul.mubr.bf16.gmra.mrb[0].mxu0 %v773
        %v809 = vpop.f32.mrb[0].mxu0
        %v810 = vadd.f32 0.0, %v809
        %v811 = vpop.f32.mrb[0].mxu0
        %v812 = vpop.f32.mrb[0].mxu0
        %v813 = vadd.f32 0.0, %v812
        %v814 = vpop.f32.mrb[0].mxu0
        %815 = vdwg.mxu0
        %v816 = vpack.c.bf16 %v813, %v810
        %818 = vrot.lane.b32.xlu0 %v816, 24
        %v819 = vpop.permute.xlu0 %818
        %vm821 = vcmask 261312
        %822 = vst.msk [vmem:[#allocation2] sm:$0xff] %vm821, %v819
        %v823 = vld [vmem:[#allocation2] sm:$0xff]
        %v824 = vld [vmem:[%s2] sm:$0xf]
        %v825 = vld [vmem:[%s2 + $0x4] sm:$0xf]
        %v826 = vld [vmem:[%s2 + $0x8] sm:$0xf]
        %v827 = vld [vmem:[%s2 + $0xc] sm:$0xf]
        %v828 = vld [vmem:[%s3] sm:$0x1]
        %v830 = vlaneseq
        %v831 = vshrl.u32 %v830, 7
        %v832 = vsub.s32 0, %v831
        %v833 = vrot.slane %v828, %v832
        %v839 = vunpack.c.l.b16 %v824
        %v840 = vunpack.c.l.b16 %v825
        %v841 = vunpack.c.l.b16 %v826
        %v842 = vunpack.c.l.b16 %v827
        %v843 = vpack.c.b16 %v840, %v839
        %v844 = vpack.c.b16 %v842, %v841
        %v848 = vsel %vm258, %v823, 0
        %850 = vmatprep.subr.bf16.mxu0 0
        %851 = vmatpush1.bf16.msra.mxu0 %v843
        %852 = vmatprep.subr.bf16.mxu0 0
        %853 = vmatpush1.bf16.msra.mxu0 %v844
        %854 = vmatprep.subr.bf16.mxu0 0
        %855 = vmatpush1.bf16.msra.mxu0 0
        %856 = vmatprep.subr.bf16.mxu0 0
        %857 = vmatpush1.bf16.msra.mxu0 0
        %858 = vmatprep.subr.bf16.mxu0 0
        %859 = vmatpush1.bf16.msra.mxu0 0
        %860 = vmatprep.subr.bf16.mxu0 0
        %861 = vmatpush1.bf16.msra.mxu0 0
        %862 = vmatprep.subr.bf16.mxu0 0
        %863 = vmatpush1.bf16.msra.mxu0 0
        %864 = vmatprep.subr.bf16.mxu0 0
        %865 = vmatpush1.bf16.msra.mxu0 0
        %866 = vmatprep.subr.bf16.mxu0 0
        %867 = vmatpush1.bf16.msra.mxu0 0
        %868 = vmatprep.subr.bf16.mxu0 0
        %869 = vmatpush1.bf16.msra.mxu0 0
        %870 = vmatprep.subr.bf16.mxu0 0
        %871 = vmatpush1.bf16.msra.mxu0 0
        %872 = vmatprep.subr.bf16.mxu0 0
        %873 = vmatpush1.bf16.msra.mxu0 0
        %874 = vmatprep.subr.bf16.mxu0 0
        %875 = vmatpush1.bf16.msra.mxu0 0
        %876 = vmatprep.subr.bf16.mxu0 0
        %877 = vmatpush1.bf16.msra.mxu0 0
        %878 = vmatprep.subr.bf16.mxu0 0
        %879 = vmatpush1.bf16.msra.mxu0 0
        %880 = vmatprep.subr.bf16.mxu0 0
        %881 = vmatpush1.bf16.msra.mxu0 0
        %882 = vmatprep.mubr.bf16.mxu0 0
        %883 = vmatmul.mubr.bf16.gmra.mrb[0].mxu0 %v848
        %v884 = vpop.f32.mrb[0].mxu0
        %v885 = vadd.f32 %v833, %v884
        %v886 = vpop.f32.mrb[0].mxu0
        %v887 = vpop.f32.mrb[0].mxu0
        %v888 = vadd.f32 %v833, %v887
        %v889 = vpop.f32.mrb[0].mxu0
        %890 = vdwg.mxu0
        %891 = vst.msk [vmem:[%s221] sm:$0xff] %vm258, %v885
        %892 = vst.msk [vmem:[%s221 + $0x8] sm:$0xff] %vm258, %v888
        %s893 = sand.u32 %s120, 1
        %s894 = scalar_lea.sflag [#allocation4], %s893
        %s895 = sand.u32 %s120, 1
        %s896 = smul.addr %s895, 16
        %s897 = scalar_lea.vmem [#allocation3], %s896
        %s898 = sand.u32 %s146, 1
        %s899 = scalar_lea.sflag [#allocation6], %s898
        %s900 = sand.u32 %s146, 1
        %s901 = smul.addr %s900, 64
        %s902 = scalar_lea.vmem [#allocation5], %s901
        // Predicated region
        $region37: #{spatial_self_attention.1} parent=35 // pred_check
          %p903 = pneg %p130
        $region38: #{spatial_self_attention.1} parent=35 // pred_check_branch
          %905 = sbr.rel (%p903) target = $region40
        $region39: #{spatial_self_attention.1} parent=35 // pred_region
          %s907 = ssub.s32 256, 256
          %908 = vsyncadd %s894, %s907
          %s909 = smul.addr %s23, 2
          %s910 = smul.addr %s909, 128
          %s911 = scalar_lea.hbm %s4, %s910
          %s912 = sshll.u32 %s897, 4
          %s913 = int_to_ptr.vmem [resolvable:$true] %s912
          %918 = dma.vmem_to_hbm [thread:$0]  %s913, 256, %s911, %s894, 128, 128, 8
        $region40: #{spatial_self_attention.1} parent=35 // pred_fallthru
          _
        // Predicated region
        $region41: #{spatial_self_attention.1} parent=35 // pred_check
          %p919 = pneg %p156
        $region42: #{spatial_self_attention.1} parent=35 // pred_check_branch
          %921 = sbr.rel (%p919) target = $region44
        $region43: #{spatial_self_attention.1} parent=35 // pred_region
          %s923 = ssub.s32 1024, 1024
          %924 = vsyncadd %s899, %s923
          %s925 = smul.addr %s23, 8
          %s926 = smul.addr %s925, 128
          %s927 = scalar_lea.hbm %s5, %s926
          %s928 = sshll.u32 %s902, 4
          %s929 = int_to_ptr.vmem [resolvable:$true] %s928
          %934 = dma.vmem_to_hbm [thread:$0]  %s929, 1024, %s927, %s899, 128, 128, 8
        $region44: #{spatial_self_attention.1} parent=35 // pred_fallthru
          _
      $region36: #{spatial_self_attention.1} parent=5 // pred_fallthru
        _
      %p935 = scmp.le.s32.totalorder 2, %s18
      // Predicated region
      $region45: #{spatial_self_attention.1} parent=5 // pred_check
        %p936 = pneg %p935
      $region46: #{spatial_self_attention.1} parent=5 // pred_check_branch
        %938 = sbr.rel (%p936) target = $region48
      $region47: #{spatial_self_attention.1} parent=5 // pred_region
        %s939 = ssub.s32 %s18, 2
        // Predicated region
        $region49: #{spatial_self_attention.1} parent=47 // pred_check
          %p940 = pneg %p136
        $region50: #{spatial_self_attention.1} parent=47 // pred_check_branch
          %942 = sbr.rel (%p940) target = $region52
        $region51: #{spatial_self_attention.1} parent=47 // pred_region
          %s943 = sand.u32 %s121, 1
          %s944 = scalar_lea.sflag [#allocation4], %s943
          %s945 = sand.u32 %s121, 1
          %s946 = smul.addr %s945, 16
          %s947 = scalar_lea.vmem [#allocation3], %s946
          %948 = dma.done %s944, 256
        $region52: #{spatial_self_attention.1} parent=47 // pred_fallthru
          _
        // Predicated region
        $region53: #{spatial_self_attention.1} parent=47 // pred_check
          %p949 = pneg %p162
        $region54: #{spatial_self_attention.1} parent=47 // pred_check_branch
          %951 = sbr.rel (%p949) target = $region56
        $region55: #{spatial_self_attention.1} parent=47 // pred_region
          %s952 = sand.u32 %s147, 1
          %s953 = scalar_lea.sflag [#allocation6], %s952
          %s954 = sand.u32 %s147, 1
          %s955 = smul.addr %s954, 64
          %s956 = scalar_lea.vmem [#allocation5], %s955
          %957 = dma.done %s953, 1024
        $region56: #{spatial_self_attention.1} parent=47 // pred_fallthru
          _
      $region48: #{spatial_self_attention.1} parent=5 // pred_fallthru
        _
    $region6: #{spatial_self_attention.1} parent=1 // loop_footer
      %s22 = sadd.s32 1, %s18
    $region7: #{spatial_self_attention.1} parent=1 // loop_footer_branch
      %17 = sbr.rel target = $region3
    $region8: #{spatial_self_attention.1} parent=1 // loop_exit
      _
    %958 = vsyncpa [#allocation4], 1
    %s959 = scalar_lea.sflag [#allocation4], 1
    %960 = vsyncpa %s959, 1
    %961 = vsyncpa [#allocation6], 1
    %s962 = scalar_lea.sflag [#allocation6], 1
    %963 = vsyncpa %s962, 1

</llo_original>
